<compile_context>
chip_gen: v6e
topology: v6e:2x2x1
jax: 0.10.0
libtpu: 0.0.40
codegen_flags: <defaults>
</compile_context>

<pallas_src>
import jax
import jax.numpy as jnp
import numpy as np
from jax.experimental import pallas as pl
from jax.experimental.pallas import tpu as pltpu

# ---- Block configuration ----
CIN, COUT = 4, 8
CP = 8                      # input channels padded 4 -> 8 so W*CP == 128 lanes
H = W = 16
N = 2
NH = N * H                  # 32 sublanes: the whole batch packed into the sublane axis
LANES = W * CP              # 128
EPS = 1e-5                  # nn.BatchNorm2d default eps


# ----------------------------- kernel helpers -----------------------------
def _depthwise3x3(t, taps, row_ok, lane_ok):
    """3x3 depthwise conv, stride 1, padding 1, on lane-dense (N*H, W*C) data.

    t:    (NH, LANES) activations, channel-minor packing (lane = w*C + c), batch in
          sublanes (row = n*H + h).
    taps: (9, LANES) tap weights, row (dy+1)*3+(dx+1), each tiled W times over lanes.
    Rolls that cross image boundaries are zeroed by the per-image row masks.
    """
    acc = None
    for dy in (-1, 0, 1):
        for dx in (-1, 0, 1):
            s = t
            if dy != 0:
                s = pltpu.roll(s, (-dy) % NH, axis=0)           # sublane shift (XLU)
            if dx != 0:
                s = pltpu.roll(s, (-dx * CP) % LANES, axis=1)   # lane shift by C (XLU)
            m = row_ok.get(dy)
            lm = lane_ok.get(dx)
            if m is None:
                m = lm
            elif lm is not None:
                m = m & lm
            if m is not None:
                s = jnp.where(m, s, 0.0)                        # zero-padding boundary
            ti = (dy + 1) * 3 + (dx + 1)
            term = s * taps[ti:ti + 1, :]                       # (1,LANES) broadcast FMA
            acc = term if acc is None else acc + term
    return acc


# ------------------------------- the kernel -------------------------------
def block_kernel(x_ref, w_ref, dwt_ref, b_ref, out_ref):
    x = x_ref[...]                   # (NH, LANES) padded-channel, lane-dense batch
    bias = b_ref[...]                # (2, LANES)  rows: bn1 / (bn2 + bn_skip) folded

    # Boundary-validity masks shared by both depthwise convs (same (NH, W*8) packing).
    row_idx = jax.lax.broadcasted_iota(jnp.int32, (NH, LANES), 0)
    lane_idx = jax.lax.broadcasted_iota(jnp.int32, (NH, LANES), 1)
    row_in = row_idx & (H - 1)       # row within its image (H is a power of two)
    row_ok = {-1: row_in >= 1, 1: row_in <= H - 2}
    lane_ok = {-1: lane_idx >= CP, 1: lane_idx < (W - 1) * CP}

    # --- rep unit 1: ReLU -> depthwise 3x3 -> pointwise 1x1 (+ folded BN1) ---
    t = jnp.maximum(x, 0.0)
    y = _depthwise3x3(t, dwt_ref[0], row_ok, lane_ok)
    y = jnp.dot(y, w_ref[0], preferred_element_type=jnp.float32) + bias[0:1, :]

    # --- rep unit 2: ReLU -> depthwise 3x3 -> pointwise 1x1 ---
    t = jnp.maximum(y, 0.0)
    z = _depthwise3x3(t, dwt_ref[1], row_ok, lane_ok)
    z = jnp.dot(z, w_ref[1], preferred_element_type=jnp.float32)

    # --- skip path: 1x1 conv on the raw input ---
    s = jnp.dot(x, w_ref[2], preferred_element_type=jnp.float32)

    # Residual add; BN2 and BN_skip biases were merged into bias row 1.
    out_ref[...] = z + s + bias[1:2, :]      # lane-dense (32, 128) unmasked store


# ------------------------------- wrapper -----------------------------------
def block_forward(x_lanes, weights, dw_taps, biases):
    nh = x_lanes.shape[0]
    return pl.pallas_call(
        block_kernel,
        out_shape=jax.ShapeDtypeStruct((nh, W * COUT), jnp.float32),
        grid_spec=pltpu.PrefetchScalarGridSpec(
            num_scalar_prefetch=0,
            grid=(1,),                                   # single step: whole batch
            in_specs=[
                pl.BlockSpec((nh, LANES), lambda i: (0, 0)),
                pl.BlockSpec(weights.shape, lambda i: (0, 0, 0)),
                pl.BlockSpec(dw_taps.shape, lambda i: (0, 0, 0)),
                pl.BlockSpec(biases.shape, lambda i: (0, 0)),
            ],
            out_specs=pl.BlockSpec((nh, W * COUT), lambda i: (0, 0)),
        ),
        compiler_params=pltpu.CompilerParams(
            dimension_semantics=("arbitrary",)),
    )(x_lanes, weights, dw_taps, biases)


# -------------------- deterministic parameter construction -----------------
def init_params(key):
    keys = jax.random.split(key, 17)
    nrm = lambda k, s: 0.2 * jax.random.normal(k, s, jnp.float32)
    pos = lambda k, s: jax.random.uniform(k, s, jnp.float32, 0.5, 1.5)
    p = {}
    p['dw1'] = nrm(keys[0], (CIN, 1, 3, 3))        # depthwise (groups=CIN) OIHW
    p['pw1'] = nrm(keys[1], (COUT, CIN, 1, 1))     # pointwise OIHW
    p['bn1'] = (pos(keys[2], (COUT,)), nrm(keys[3], (COUT,)),
                nrm(keys[4], (COUT,)), pos(keys[5], (COUT,)))   # gamma, beta, mean, var
    p['dw2'] = nrm(keys[6], (COUT, 1, 3, 3))
    p['pw2'] = nrm(keys[7], (COUT, COUT, 1, 1))
    p['bn2'] = (pos(keys[8], (COUT,)), nrm(keys[9], (COUT,)),
                nrm(keys[10], (COUT,)), pos(keys[11], (COUT,)))
    p['skw'] = nrm(keys[12], (COUT, CIN, 1, 1))
    p['bns'] = (pos(keys[13], (COUT,)), nrm(keys[14], (COUT,)),
                nrm(keys[15], (COUT,)), pos(keys[16], (COUT,)))
    return p


def to_kernel_params(p):
    """Fold BN into the 1x1 convs, pad channels 4->8, pack lane-dense operands."""
    def fold(w_oi, bn):                               # w_oi: (O, I) from (O, I, 1, 1)
        g, b, m, v = bn
        scale = g * jax.lax.rsqrt(v + EPS)            # (O,)
        w_io = jnp.transpose(w_oi) * scale[None, :]   # (I, O) with BN-scaled columns
        bias = b - m * scale                          # (O,)
        return w_io, bias

    pw1, b1 = fold(p['pw1'][:, :, 0, 0], p['bn1'])    # (CIN, COUT)
    pw2, b2 = fold(p['pw2'][:, :, 0, 0], p['bn2'])    # (COUT, COUT)
    skw, bs = fold(p['skw'][:, :, 0, 0], p['bns'])    # (CIN, COUT)

    pad_rows = lambda w: jnp.concatenate(
        [w, jnp.zeros((CP - w.shape[0], COUT), w.dtype)], axis=0)
    pw1, skw = pad_rows(pw1), pad_rows(skw)           # (CP, COUT)

    eye = jnp.eye(W, dtype=jnp.float32)
    big = lambda w: jnp.kron(eye, w)                  # block-diagonal (W*CP, W*COUT)
    weights = jnp.stack([big(pw1), big(pw2), big(skw)])                 # (3,128,128)
    biases = jnp.stack([jnp.tile(b1, W), jnp.tile(b2 + bs, W)])         # (2,128) merged

    def taps(k_c33):                                  # (C,3,3) -> (9, W*C) tiled taps
        k = jnp.transpose(k_c33, (1, 2, 0)).reshape(9, -1)   # row (dy)*3+(dx), cols = C
        return jnp.tile(k, (1, W))
    dw1 = jnp.concatenate(
        [p['dw1'][:, 0], jnp.zeros((CP - CIN, 3, 3), jnp.float32)], axis=0)   # (CP,3,3)
    dw2 = p['dw2'][:, 0]                                                      # (COUT,3,3)
    dw_taps = jnp.stack([taps(dw1), taps(dw2)])       # (2, 9, 128)

    return weights, dw_taps, biases


def to_kernel_input(x_nchw):
    n = x_nchw.shape[0]
    x = jnp.transpose(x_nchw, (0, 2, 3, 1))                      # NHWC
    x = jnp.pad(x, ((0, 0), (0, 0), (0, 0), (0, CP - CIN)))      # channel pad 4 -> 8
    return x.reshape(n * H, W * CP)                              # (N*H, 128) lane-dense


def from_kernel_output(o_lanes):
    n = o_lanes.shape[0] // H
    return jnp.transpose(o_lanes.reshape(n, H, W, COUT), (0, 3, 1, 2))   # back to NCHW


# -------------------------- pure-JAX reference (NCHW) ----------------------
def reference_nchw(x, p):
    def bn(x, params):
        g, b, m, v = params
        inv = g / jnp.sqrt(v + EPS)
        return (x - m[None, :, None, None]) * inv[None, :, None, None] + b[None, :, None, None]

    def dwconv(x, w):
        c = x.shape[1]
        return jax.lax.conv_general_dilated(
            x, w, (1, 1), ((1, 1), (1, 1)), feature_group_count=c,
            dimension_numbers=('NCHW', 'OIHW', 'NCHW'))

    def pwconv(x, w):
        return jax.lax.conv_general_dilated(
            x, w, (1, 1), 'VALID', dimension_numbers=('NCHW', 'OIHW', 'NCHW'))

    t = jax.nn.relu(x)
    t = bn(pwconv(dwconv(t, p['dw1']), p['pw1']), p['bn1'])
    t = jax.nn.relu(t)
    t = bn(pwconv(dwconv(t, p['dw2']), p['pw2']), p['bn2'])
    skip = bn(pwconv(x, p['skw']), p['bns'])
    return t + skip


# ----------------------------------- main -----------------------------------
if __name__ == "__main__":
    key = jax.random.PRNGKey(0)
    kx, kp = jax.random.split(key)

    x_nchw = jax.random.normal(kx, (N, CIN, H, W), jnp.float32)   # PyTorch-style input
    params = init_params(kp)
    weights, dw_taps, biases = to_kernel_params(params)

    x_lanes = to_kernel_input(x_nchw)
    out_lanes = block_forward(x_lanes, weights, dw_taps, biases)
    out_lanes = jax.block_until_ready(out_lanes)

    out_nchw = from_kernel_output(out_lanes)
    ref = reference_nchw(x_nchw, params)
    np.testing.assert_allclose(np.asarray(out_nchw), np.asarray(ref),
                               rtol=1e-4, atol=1e-4)

    print("KERNEL_OK")
</pallas_src>

<mosaic_0001>
module attributes {stable_mosaic.version = 11 : i64} {
  func.func @block_kernel(%arg0: i32, %arg1: memref<32x128xf32, #tpu.memory_space<vmem>>, %arg2: memref<3x128x128xf32, #tpu.memory_space<vmem>>, %arg3: memref<2x9x128xf32, #tpu.memory_space<vmem>>, %arg4: memref<2x128xf32, #tpu.memory_space<vmem>>, %arg5: memref<32x128xf32, #tpu.memory_space<vmem>>) attributes {dimension_semantics = [#tpu.dimension_semantics<arbitrary>], iteration_bounds = array<i64: 1>, scalar_prefetch = 0 : i64, scratch_operands = 0 : i64, tpu.core_type = #tpu.core_type<tc>, window_params = [{pipeline_mode = #tpu.pipeline_mode<synchronous>, transform_indices = @transform_0, window_bounds = array<i64: 32, 128>}, {pipeline_mode = #tpu.pipeline_mode<synchronous>, transform_indices = @transform_1, window_bounds = array<i64: 3, 128, 128>}, {pipeline_mode = #tpu.pipeline_mode<synchronous>, transform_indices = @transform_2, window_bounds = array<i64: 2, 9, 128>}, {pipeline_mode = #tpu.pipeline_mode<synchronous>, transform_indices = @transform_3, window_bounds = array<i64: 2, 128>}, {pipeline_mode = #tpu.pipeline_mode<synchronous>, transform_indices = @transform_4, window_bounds = array<i64: 32, 128>}]} {
    %c0 = arith.constant 0 : index
    %c0_0 = arith.constant 0 : index
    %0 = vector.load %arg1[%c0, %c0_0] : memref<32x128xf32, #tpu.memory_space<vmem>>, vector<32x128xf32>
    %c0_1 = arith.constant 0 : index
    %c0_2 = arith.constant 0 : index
    %1 = vector.load %arg4[%c0_1, %c0_2] : memref<2x128xf32, #tpu.memory_space<vmem>>, vector<2x128xf32>
    %2 = tpu.iota {dimensions = array<i32: 0>} : vector<32x128xi32>
    %3 = tpu.iota {dimensions = array<i32: 1>} : vector<32x128xi32>
    %c15_i32 = arith.constant 15 : i32
    %4 = vector.broadcast %c15_i32 : i32 to vector<32x128xi32>
    %5 = arith.andi %2, %4 : vector<32x128xi32>
    %c1_i32 = arith.constant 1 : i32
    %6 = vector.broadcast %c1_i32 : i32 to vector<32x128xi32>
    %7 = arith.cmpi sge, %5, %6 : vector<32x128xi32>
    %c14_i32 = arith.constant 14 : i32
    %8 = vector.broadcast %c14_i32 : i32 to vector<32x128xi32>
    %9 = arith.cmpi sle, %5, %8 : vector<32x128xi32>
    %c8_i32 = arith.constant 8 : i32
    %10 = vector.broadcast %c8_i32 : i32 to vector<32x128xi32>
    %11 = arith.cmpi sge, %3, %10 : vector<32x128xi32>
    %c120_i32 = arith.constant 120 : i32
    %12 = vector.broadcast %c120_i32 : i32 to vector<32x128xi32>
    %13 = arith.cmpi slt, %3, %12 : vector<32x128xi32>
    %cst = arith.constant 0.000000e+00 : f32
    %14 = vector.broadcast %cst : f32 to vector<32x128xf32>
    %15 = arith.maximumf %0, %14 : vector<32x128xf32>
    %c0_3 = arith.constant 0 : index
    %c0_4 = arith.constant 0 : index
    %c0_5 = arith.constant 0 : index
    %16 = vector.load %arg3[%c0_3, %c0_4, %c0_5] : memref<2x9x128xf32, #tpu.memory_space<vmem>>, vector<1x9x128xf32>
    %17 = vector.shape_cast %16 : vector<1x9x128xf32> to vector<9x128xf32>
    %c1_i32_6 = arith.constant 1 : i32
    %18 = tpu.dynamic_rotate %15 by %c1_i32_6 dim 0 : vector<32x128xf32>, i32 -> vector<32x128xf32>
    %c8_i32_7 = arith.constant 8 : i32
    %19 = tpu.dynamic_rotate %18 by %c8_i32_7 dim 1 : vector<32x128xf32>, i32 -> vector<32x128xf32>
    %20 = arith.andi %7, %11 : vector<32x128xi1>
    %cst_8 = arith.constant 0.000000e+00 : f32
    %21 = vector.broadcast %cst_8 : f32 to vector<32x128xf32>
    %22 = arith.select %20, %19, %21 : vector<32x128xi1>, vector<32x128xf32>
    %23 = vector.extract_strided_slice %17 {offsets = [0, 0], sizes = [1, 128], strides = [1, 1]} : vector<9x128xf32> to vector<1x128xf32>
    %24 = vector.broadcast %23 : vector<1x128xf32> to vector<32x128xf32>
    %25 = arith.mulf %22, %24 : vector<32x128xf32>
    %c1_i32_9 = arith.constant 1 : i32
    %26 = tpu.dynamic_rotate %15 by %c1_i32_9 dim 0 : vector<32x128xf32>, i32 -> vector<32x128xf32>
    %cst_10 = arith.constant 0.000000e+00 : f32
    %27 = vector.broadcast %cst_10 : f32 to vector<32x128xf32>
    %28 = arith.select %7, %26, %27 : vector<32x128xi1>, vector<32x128xf32>
    %29 = vector.extract_strided_slice %17 {offsets = [1, 0], sizes = [1, 128], strides = [1, 1]} : vector<9x128xf32> to vector<1x128xf32>
    %30 = vector.broadcast %29 : vector<1x128xf32> to vector<32x128xf32>
    %31 = arith.mulf %28, %30 : vector<32x128xf32>
    %32 = arith.addf %25, %31 : vector<32x128xf32>
    %c1_i32_11 = arith.constant 1 : i32
    %33 = tpu.dynamic_rotate %15 by %c1_i32_11 dim 0 : vector<32x128xf32>, i32 -> vector<32x128xf32>
    %c120_i32_12 = arith.constant 120 : i32
    %34 = tpu.dynamic_rotate %33 by %c120_i32_12 dim 1 : vector<32x128xf32>, i32 -> vector<32x128xf32>
    %35 = arith.andi %7, %13 : vector<32x128xi1>
    %cst_13 = arith.constant 0.000000e+00 : f32
    %36 = vector.broadcast %cst_13 : f32 to vector<32x128xf32>
    %37 = arith.select %35, %34, %36 : vector<32x128xi1>, vector<32x128xf32>
    %38 = vector.extract_strided_slice %17 {offsets = [2, 0], sizes = [1, 128], strides = [1, 1]} : vector<9x128xf32> to vector<1x128xf32>
    %39 = vector.broadcast %38 : vector<1x128xf32> to vector<32x128xf32>
    %40 = arith.mulf %37, %39 : vector<32x128xf32>
    %41 = arith.addf %32, %40 : vector<32x128xf32>
    %c8_i32_14 = arith.constant 8 : i32
    %42 = tpu.dynamic_rotate %15 by %c8_i32_14 dim 1 : vector<32x128xf32>, i32 -> vector<32x128xf32>
    %cst_15 = arith.constant 0.000000e+00 : f32
    %43 = vector.broadcast %cst_15 : f32 to vector<32x128xf32>
    %44 = arith.select %11, %42, %43 : vector<32x128xi1>, vector<32x128xf32>
    %45 = vector.extract_strided_slice %17 {offsets = [3, 0], sizes = [1, 128], strides = [1, 1]} : vector<9x128xf32> to vector<1x128xf32>
    %46 = vector.broadcast %45 : vector<1x128xf32> to vector<32x128xf32>
    %47 = arith.mulf %44, %46 : vector<32x128xf32>
    %48 = arith.addf %41, %47 : vector<32x128xf32>
    %49 = vector.extract_strided_slice %17 {offsets = [4, 0], sizes = [1, 128], strides = [1, 1]} : vector<9x128xf32> to vector<1x128xf32>
    %50 = vector.broadcast %49 : vector<1x128xf32> to vector<32x128xf32>
    %51 = arith.mulf %15, %50 : vector<32x128xf32>
    %52 = arith.addf %48, %51 : vector<32x128xf32>
    %c120_i32_16 = arith.constant 120 : i32
    %53 = tpu.dynamic_rotate %15 by %c120_i32_16 dim 1 : vector<32x128xf32>, i32 -> vector<32x128xf32>
    %cst_17 = arith.constant 0.000000e+00 : f32
    %54 = vector.broadcast %cst_17 : f32 to vector<32x128xf32>
    %55 = arith.select %13, %53, %54 : vector<32x128xi1>, vector<32x128xf32>
    %56 = vector.extract_strided_slice %17 {offsets = [5, 0], sizes = [1, 128], strides = [1, 1]} : vector<9x128xf32> to vector<1x128xf32>
    %57 = vector.broadcast %56 : vector<1x128xf32> to vector<32x128xf32>
    %58 = arith.mulf %55, %57 : vector<32x128xf32>
    %59 = arith.addf %52, %58 : vector<32x128xf32>
    %c31_i32 = arith.constant 31 : i32
    %60 = tpu.dynamic_rotate %15 by %c31_i32 dim 0 : vector<32x128xf32>, i32 -> vector<32x128xf32>
    %c8_i32_18 = arith.constant 8 : i32
    %61 = tpu.dynamic_rotate %60 by %c8_i32_18 dim 1 : vector<32x128xf32>, i32 -> vector<32x128xf32>
    %62 = arith.andi %9, %11 : vector<32x128xi1>
    %cst_19 = arith.constant 0.000000e+00 : f32
    %63 = vector.broadcast %cst_19 : f32 to vector<32x128xf32>
    %64 = arith.select %62, %61, %63 : vector<32x128xi1>, vector<32x128xf32>
    %65 = vector.extract_strided_slice %17 {offsets = [6, 0], sizes = [1, 128], strides = [1, 1]} : vector<9x128xf32> to vector<1x128xf32>
    %66 = vector.broadcast %65 : vector<1x128xf32> to vector<32x128xf32>
    %67 = arith.mulf %64, %66 : vector<32x128xf32>
    %68 = arith.addf %59, %67 : vector<32x128xf32>
    %c31_i32_20 = arith.constant 31 : i32
    %69 = tpu.dynamic_rotate %15 by %c31_i32_20 dim 0 : vector<32x128xf32>, i32 -> vector<32x128xf32>
    %cst_21 = arith.constant 0.000000e+00 : f32
    %70 = vector.broadcast %cst_21 : f32 to vector<32x128xf32>
    %71 = arith.select %9, %69, %70 : vector<32x128xi1>, vector<32x128xf32>
    %72 = vector.extract_strided_slice %17 {offsets = [7, 0], sizes = [1, 128], strides = [1, 1]} : vector<9x128xf32> to vector<1x128xf32>
    %73 = vector.broadcast %72 : vector<1x128xf32> to vector<32x128xf32>
    %74 = arith.mulf %71, %73 : vector<32x128xf32>
    %75 = arith.addf %68, %74 : vector<32x128xf32>
    %c31_i32_22 = arith.constant 31 : i32
    %76 = tpu.dynamic_rotate %15 by %c31_i32_22 dim 0 : vector<32x128xf32>, i32 -> vector<32x128xf32>
    %c120_i32_23 = arith.constant 120 : i32
    %77 = tpu.dynamic_rotate %76 by %c120_i32_23 dim 1 : vector<32x128xf32>, i32 -> vector<32x128xf32>
    %78 = arith.andi %9, %13 : vector<32x128xi1>
    %cst_24 = arith.constant 0.000000e+00 : f32
    %79 = vector.broadcast %cst_24 : f32 to vector<32x128xf32>
    %80 = arith.select %78, %77, %79 : vector<32x128xi1>, vector<32x128xf32>
    %81 = vector.extract_strided_slice %17 {offsets = [8, 0], sizes = [1, 128], strides = [1, 1]} : vector<9x128xf32> to vector<1x128xf32>
    %82 = vector.broadcast %81 : vector<1x128xf32> to vector<32x128xf32>
    %83 = arith.mulf %80, %82 : vector<32x128xf32>
    %84 = arith.addf %75, %83 : vector<32x128xf32>
    %c0_25 = arith.constant 0 : index
    %c0_26 = arith.constant 0 : index
    %c0_27 = arith.constant 0 : index
    %85 = vector.load %arg2[%c0_25, %c0_26, %c0_27] : memref<3x128x128xf32, #tpu.memory_space<vmem>>, vector<1x128x128xf32>
    %86 = vector.shape_cast %85 : vector<1x128x128xf32> to vector<128x128xf32>
    %cst_28 = arith.constant dense<0.000000e+00> : vector<32x128xf32>
    %87 = tpu.matmul %84, %86, %cst_28 {dimension_numbers = #tpu.dot_dimension_numbers<[1], [0], [0], [1], [0, 0, 1, 1], [], []>} : vector<32x128xf32>, vector<128x128xf32>, vector<32x128xf32> -> vector<32x128xf32>
    %88 = vector.extract_strided_slice %1 {offsets = [0, 0], sizes = [1, 128], strides = [1, 1]} : vector<2x128xf32> to vector<1x128xf32>
    %89 = vector.broadcast %88 : vector<1x128xf32> to vector<32x128xf32>
    %90 = arith.addf %87, %89 : vector<32x128xf32>
    %cst_29 = arith.constant 0.000000e+00 : f32
    %91 = vector.broadcast %cst_29 : f32 to vector<32x128xf32>
    %92 = arith.maximumf %90, %91 : vector<32x128xf32>
    %c1 = arith.constant 1 : index
    %c0_30 = arith.constant 0 : index
    %c0_31 = arith.constant 0 : index
    %93 = vector.load %arg3[%c1, %c0_30, %c0_31] : memref<2x9x128xf32, #tpu.memory_space<vmem>>, vector<1x9x128xf32>
    %94 = vector.shape_cast %93 : vector<1x9x128xf32> to vector<9x128xf32>
    %c1_i32_32 = arith.constant 1 : i32
    %95 = tpu.dynamic_rotate %92 by %c1_i32_32 dim 0 : vector<32x128xf32>, i32 -> vector<32x128xf32>
    %c8_i32_33 = arith.constant 8 : i32
    %96 = tpu.dynamic_rotate %95 by %c8_i32_33 dim 1 : vector<32x128xf32>, i32 -> vector<32x128xf32>
    %97 = arith.andi %7, %11 : vector<32x128xi1>
    %cst_34 = arith.constant 0.000000e+00 : f32
    %98 = vector.broadcast %cst_34 : f32 to vector<32x128xf32>
    %99 = arith.select %97, %96, %98 : vector<32x128xi1>, vector<32x128xf32>
    %100 = vector.extract_strided_slice %94 {offsets = [0, 0], sizes = [1, 128], strides = [1, 1]} : vector<9x128xf32> to vector<1x128xf32>
    %101 = vector.broadcast %100 : vector<1x128xf32> to vector<32x128xf32>
    %102 = arith.mulf %99, %101 : vector<32x128xf32>
    %c1_i32_35 = arith.constant 1 : i32
    %103 = tpu.dynamic_rotate %92 by %c1_i32_35 dim 0 : vector<32x128xf32>, i32 -> vector<32x128xf32>
    %cst_36 = arith.constant 0.000000e+00 : f32
    %104 = vector.broadcast %cst_36 : f32 to vector<32x128xf32>
    %105 = arith.select %7, %103, %104 : vector<32x128xi1>, vector<32x128xf32>
    %106 = vector.extract_strided_slice %94 {offsets = [1, 0], sizes = [1, 128], strides = [1, 1]} : vector<9x128xf32> to vector<1x128xf32>
    %107 = vector.broadcast %106 : vector<1x128xf32> to vector<32x128xf32>
    %108 = arith.mulf %105, %107 : vector<32x128xf32>
    %109 = arith.addf %102, %108 : vector<32x128xf32>
    %c1_i32_37 = arith.constant 1 : i32
    %110 = tpu.dynamic_rotate %92 by %c1_i32_37 dim 0 : vector<32x128xf32>, i32 -> vector<32x128xf32>
    %c120_i32_38 = arith.constant 120 : i32
    %111 = tpu.dynamic_rotate %110 by %c120_i32_38 dim 1 : vector<32x128xf32>, i32 -> vector<32x128xf32>
    %112 = arith.andi %7, %13 : vector<32x128xi1>
    %cst_39 = arith.constant 0.000000e+00 : f32
    %113 = vector.broadcast %cst_39 : f32 to vector<32x128xf32>
    %114 = arith.select %112, %111, %113 : vector<32x128xi1>, vector<32x128xf32>
    %115 = vector.extract_strided_slice %94 {offsets = [2, 0], sizes = [1, 128], strides = [1, 1]} : vector<9x128xf32> to vector<1x128xf32>
    %116 = vector.broadcast %115 : vector<1x128xf32> to vector<32x128xf32>
    %117 = arith.mulf %114, %116 : vector<32x128xf32>
    %118 = arith.addf %109, %117 : vector<32x128xf32>
    %c8_i32_40 = arith.constant 8 : i32
    %119 = tpu.dynamic_rotate %92 by %c8_i32_40 dim 1 : vector<32x128xf32>, i32 -> vector<32x128xf32>
    %cst_41 = arith.constant 0.000000e+00 : f32
    %120 = vector.broadcast %cst_41 : f32 to vector<32x128xf32>
    %121 = arith.select %11, %119, %120 : vector<32x128xi1>, vector<32x128xf32>
    %122 = vector.extract_strided_slice %94 {offsets = [3, 0], sizes = [1, 128], strides = [1, 1]} : vector<9x128xf32> to vector<1x128xf32>
    %123 = vector.broadcast %122 : vector<1x128xf32> to vector<32x128xf32>
    %124 = arith.mulf %121, %123 : vector<32x128xf32>
    %125 = arith.addf %118, %124 : vector<32x128xf32>
    %126 = vector.extract_strided_slice %94 {offsets = [4, 0], sizes = [1, 128], strides = [1, 1]} : vector<9x128xf32> to vector<1x128xf32>
    %127 = vector.broadcast %126 : vector<1x128xf32> to vector<32x128xf32>
    %128 = arith.mulf %92, %127 : vector<32x128xf32>
    %129 = arith.addf %125, %128 : vector<32x128xf32>
    %c120_i32_42 = arith.constant 120 : i32
    %130 = tpu.dynamic_rotate %92 by %c120_i32_42 dim 1 : vector<32x128xf32>, i32 -> vector<32x128xf32>
    %cst_43 = arith.constant 0.000000e+00 : f32
    %131 = vector.broadcast %cst_43 : f32 to vector<32x128xf32>
    %132 = arith.select %13, %130, %131 : vector<32x128xi1>, vector<32x128xf32>
    %133 = vector.extract_strided_slice %94 {offsets = [5, 0], sizes = [1, 128], strides = [1, 1]} : vector<9x128xf32> to vector<1x128xf32>
    %134 = vector.broadcast %133 : vector<1x128xf32> to vector<32x128xf32>
    %135 = arith.mulf %132, %134 : vector<32x128xf32>
    %136 = arith.addf %129, %135 : vector<32x128xf32>
    %c31_i32_44 = arith.constant 31 : i32
    %137 = tpu.dynamic_rotate %92 by %c31_i32_44 dim 0 : vector<32x128xf32>, i32 -> vector<32x128xf32>
    %c8_i32_45 = arith.constant 8 : i32
    %138 = tpu.dynamic_rotate %137 by %c8_i32_45 dim 1 : vector<32x128xf32>, i32 -> vector<32x128xf32>
    %139 = arith.andi %9, %11 : vector<32x128xi1>
    %cst_46 = arith.constant 0.000000e+00 : f32
    %140 = vector.broadcast %cst_46 : f32 to vector<32x128xf32>
    %141 = arith.select %139, %138, %140 : vector<32x128xi1>, vector<32x128xf32>
    %142 = vector.extract_strided_slice %94 {offsets = [6, 0], sizes = [1, 128], strides = [1, 1]} : vector<9x128xf32> to vector<1x128xf32>
    %143 = vector.broadcast %142 : vector<1x128xf32> to vector<32x128xf32>
    %144 = arith.mulf %141, %143 : vector<32x128xf32>
    %145 = arith.addf %136, %144 : vector<32x128xf32>
    %c31_i32_47 = arith.constant 31 : i32
    %146 = tpu.dynamic_rotate %92 by %c31_i32_47 dim 0 : vector<32x128xf32>, i32 -> vector<32x128xf32>
    %cst_48 = arith.constant 0.000000e+00 : f32
    %147 = vector.broadcast %cst_48 : f32 to vector<32x128xf32>
    %148 = arith.select %9, %146, %147 : vector<32x128xi1>, vector<32x128xf32>
    %149 = vector.extract_strided_slice %94 {offsets = [7, 0], sizes = [1, 128], strides = [1, 1]} : vector<9x128xf32> to vector<1x128xf32>
    %150 = vector.broadcast %149 : vector<1x128xf32> to vector<32x128xf32>
    %151 = arith.mulf %148, %150 : vector<32x128xf32>
    %152 = arith.addf %145, %151 : vector<32x128xf32>
    %c31_i32_49 = arith.constant 31 : i32
    %153 = tpu.dynamic_rotate %92 by %c31_i32_49 dim 0 : vector<32x128xf32>, i32 -> vector<32x128xf32>
    %c120_i32_50 = arith.constant 120 : i32
    %154 = tpu.dynamic_rotate %153 by %c120_i32_50 dim 1 : vector<32x128xf32>, i32 -> vector<32x128xf32>
    %155 = arith.andi %9, %13 : vector<32x128xi1>
    %cst_51 = arith.constant 0.000000e+00 : f32
    %156 = vector.broadcast %cst_51 : f32 to vector<32x128xf32>
    %157 = arith.select %155, %154, %156 : vector<32x128xi1>, vector<32x128xf32>
    %158 = vector.extract_strided_slice %94 {offsets = [8, 0], sizes = [1, 128], strides = [1, 1]} : vector<9x128xf32> to vector<1x128xf32>
    %159 = vector.broadcast %158 : vector<1x128xf32> to vector<32x128xf32>
    %160 = arith.mulf %157, %159 : vector<32x128xf32>
    %161 = arith.addf %152, %160 : vector<32x128xf32>
    %c1_52 = arith.constant 1 : index
    %c0_53 = arith.constant 0 : index
    %c0_54 = arith.constant 0 : index
    %162 = vector.load %arg2[%c1_52, %c0_53, %c0_54] : memref<3x128x128xf32, #tpu.memory_space<vmem>>, vector<1x128x128xf32>
    %163 = vector.shape_cast %162 : vector<1x128x128xf32> to vector<128x128xf32>
    %cst_55 = arith.constant dense<0.000000e+00> : vector<32x128xf32>
    %164 = tpu.matmul %161, %163, %cst_55 {dimension_numbers = #tpu.dot_dimension_numbers<[1], [0], [0], [1], [0, 0, 1, 1], [], []>} : vector<32x128xf32>, vector<128x128xf32>, vector<32x128xf32> -> vector<32x128xf32>
    %c2 = arith.constant 2 : index
    %c0_56 = arith.constant 0 : index
    %c0_57 = arith.constant 0 : index
    %165 = vector.load %arg2[%c2, %c0_56, %c0_57] : memref<3x128x128xf32, #tpu.memory_space<vmem>>, vector<1x128x128xf32>
    %166 = vector.shape_cast %165 : vector<1x128x128xf32> to vector<128x128xf32>
    %cst_58 = arith.constant dense<0.000000e+00> : vector<32x128xf32>
    %167 = tpu.matmul %0, %166, %cst_58 {dimension_numbers = #tpu.dot_dimension_numbers<[1], [0], [0], [1], [0, 0, 1, 1], [], []>} : vector<32x128xf32>, vector<128x128xf32>, vector<32x128xf32> -> vector<32x128xf32>
    %168 = arith.addf %164, %167 : vector<32x128xf32>
    %169 = vector.extract_strided_slice %1 {offsets = [1, 0], sizes = [1, 128], strides = [1, 1]} : vector<2x128xf32> to vector<1x128xf32>
    %170 = vector.broadcast %169 : vector<1x128xf32> to vector<32x128xf32>
    %171 = arith.addf %168, %170 : vector<32x128xf32>
    %c0_59 = arith.constant 0 : index
    %c0_60 = arith.constant 0 : index
    %172 = vector.load %arg5[%c0_59, %c0_60] : memref<32x128xf32, #tpu.memory_space<vmem>>, vector<32x128xf32>
    tpu.vector_store %arg5[%c0_59, %c0_60], %171 {strides = array<i32>} : memref<32x128xf32, #tpu.memory_space<vmem>>, vector<32x128xf32>,
    return
  }
  func.func @transform_0(%arg0: i32) -> (i32, i32) {
    %c0_i32 = arith.constant 0 : i32
    %c0_i32_0 = arith.constant 0 : i32
    %c0_i32_1 = arith.constant 0 : i32
    return %c0_i32, %c0_i32_0 : i32, i32
  }
  func.func @transform_1(%arg0: i32) -> (i32, i32, i32) {
    %c0_i32 = arith.constant 0 : i32
    %c0_i32_0 = arith.constant 0 : i32
    %c0_i32_1 = arith.constant 0 : i32
    %c0_i32_2 = arith.constant 0 : i32
    return %c0_i32, %c0_i32_0, %c0_i32_1 : i32, i32, i32
  }
  func.func @transform_2(%arg0: i32) -> (i32, i32, i32) {
    %c0_i32 = arith.constant 0 : i32
    %c0_i32_0 = arith.constant 0 : i32
    %c0_i32_1 = arith.constant 0 : i32
    %c0_i32_2 = arith.constant 0 : i32
    return %c0_i32, %c0_i32_0, %c0_i32_1 : i32, i32, i32
  }
  func.func @transform_3(%arg0: i32) -> (i32, i32) {
    %c0_i32 = arith.constant 0 : i32
    %c0_i32_0 = arith.constant 0 : i32
    %c0_i32_1 = arith.constant 0 : i32
    return %c0_i32, %c0_i32_0 : i32, i32
  }
  func.func @transform_4(%arg0: i32) -> (i32, i32) {
    %c0_i32 = arith.constant 0 : i32
    %c0_i32_0 = arith.constant 0 : i32
    %c0_i32_1 = arith.constant 0 : i32
    return %c0_i32, %c0_i32_0 : i32, i32
  }
}

</mosaic_0001>

<llo_original>
// kernel: tpu_custom_call.1
$region0: #{tpu_custom_call.1}
  #allocation0 [shape = 'u32[]', space=smem, size = 0x4, offset = 0x4, fixed_abs, tag = 'smem constant byte address 0x4 - core index']
  #allocation1 [shape = 'u32[144,128]{1,0:T(1,128)}', space=vmem, size = 0x12000, scoped, tag = 'internal scratch']
  %s0 = inlined_call_operand.vmem [shape: f32[32,128], index: 0, kind: input, shape index: {}]
  %s1 = inlined_call_operand.hbm [shape: f32[3,128,128], index: 1, kind: input, shape index: {}]
  %s2 = inlined_call_operand.vmem [shape: f32[2,9,128], index: 2, kind: input, shape index: {}]
  %s3 = inlined_call_operand.vmem [shape: f32[2,128], index: 3, kind: input, shape index: {}]
  %s4 = inlined_call_operand.hbm [shape: f32[32,128], index: 4, kind: output, shape index: {}]
  %s5 = sld [smem:[#allocation0]]
  $region30: #{tpu_custom_call.1} parent=0
    _
  %s7 = ssub.s32 1, %s5
  %s8 = scalar_select 0, %s7, %s5
  $region1: #{tpu_custom_call.1} parent=0
    #allocation2 [shape = 'u8[196608]{0}', space=vmem, size = 0x30000, scoped, tag = 'input window, operand 1, single buffered']
    #allocation3 [shape = 's32[1]{0}', space=sflag, size = 0x4, scoped, tag = 'scoped memory for tpu_custom_call.1']
    #allocation4 [shape = 's32[1]{0}', space=sflag, size = 0x4, scoped, tag = 'scoped memory for tpu_custom_call.1']
    #allocation5 [shape = 'u8[16384]{0}', space=vmem, size = 0x4000, scoped, tag = 'output window, operand 0, single buffered']
    %9 = vsyncpa [#allocation3], 0
    %10 = vsyncpa [#allocation4], 0
    // Predicated region
    $region2: #{tpu_custom_call.1} parent=1 // pred_check
      _
    $region3: #{tpu_custom_call.1} parent=1 // pred_check_branch
      %12 = sbr.rel (0) target = $region5
    $region4: #{tpu_custom_call.1} parent=1 // pred_region
      _
    $region5: #{tpu_custom_call.1} parent=1 // pred_fallthru
      _
    // Predicated region
    $region6: #{tpu_custom_call.1} parent=1 // pred_check
      _
    $region7: #{tpu_custom_call.1} parent=1 // pred_check_branch
      %14 = sbr.rel (0) target = $region9
    $region8: #{tpu_custom_call.1} parent=1 // pred_region
      %s16 = ssub.s32 6144, 6144
      %17 = vsyncadd [#allocation3], %s16
      %s18 = sshll.u32 [#allocation2], 4
      %s19 = int_to_ptr.vmem [resolvable:$true] %s18
      %24 = dma.hbm_to_vmem [thread:$0]  %s1, 6144, %s19, [#allocation3], 128, 128, 8
    $region9: #{tpu_custom_call.1} parent=1 // pred_fallthru
      _
    // Predicated region
    $region10: #{tpu_custom_call.1} parent=1 // pred_check
      _
    $region11: #{tpu_custom_call.1} parent=1 // pred_check_branch
      %26 = sbr.rel (0) target = $region13
    $region12: #{tpu_custom_call.1} parent=1 // pred_region
      _
    $region13: #{tpu_custom_call.1} parent=1 // pred_fallthru
      _
    // Predicated region
    $region14: #{tpu_custom_call.1} parent=1 // pred_check
      _
    $region15: #{tpu_custom_call.1} parent=1 // pred_check_branch
      %28 = sbr.rel (0) target = $region17
    $region16: #{tpu_custom_call.1} parent=1 // pred_region
      _
    $region17: #{tpu_custom_call.1} parent=1 // pred_fallthru
      _
    // Predicated region
    $region18: #{tpu_custom_call.1} parent=1 // pred_check
      _
    $region19: #{tpu_custom_call.1} parent=1 // pred_check_branch
      %30 = sbr.rel (0) target = $region21
    $region20: #{tpu_custom_call.1} parent=1 // pred_region
      %31 = dma.done [#allocation3], 6144
    $region21: #{tpu_custom_call.1} parent=1 // pred_fallthru
      _
    %v32 = vld [vmem:[%s0] sm:$0xff]
    %v33 = vld [vmem:[%s0 + $0x8] sm:$0xff]
    %v34 = vld [vmem:[%s0 + $0x10] sm:$0xff]
    %v35 = vld [vmem:[%s0 + $0x18] sm:$0xff]
    %v36 = vld [vmem:[%s3] sm:$0x3]
    %v37 = vlaneseq
    %v38 = vshrl.u32 %v37, 7
    %v39 = vadd.s32 %v38, 8
    %v40 = vadd.s32 %v38, 16
    %v41 = vadd.s32 %v38, 24
    %v42 = vlaneseq
    %v43 = vand.u32 %v42, 127
    %v44 = vand.u32 %v38, 15
    %v45 = vand.u32 %v39, 15
    %v46 = vand.u32 %v40, 15
    %v47 = vand.u32 %v41, 15
    %vm48 = vcmp.ge.s32.totalorder %v44, 1
    %vm49 = vcmp.ge.s32.totalorder %v45, 1
    %vm50 = vcmp.ge.s32.totalorder %v46, 1
    %vm51 = vcmp.ge.s32.totalorder %v47, 1
    %vm52 = vcmp.le.s32.totalorder %v44, 14
    %vm53 = vcmp.le.s32.totalorder %v45, 14
    %vm54 = vcmp.le.s32.totalorder %v46, 14
    %vm55 = vcmp.le.s32.totalorder %v47, 14
    %vm56 = vcmp.ge.s32.totalorder %v43, 8
    %vm57 = vcmp.lt.s32.totalorder %v43, 120
    %v58 = vmax.f32 %v32, 0.0
    %v59 = vmax.f32 %v33, 0.0
    %v60 = vmax.f32 %v34, 0.0
    %v61 = vmax.f32 %v35, 0.0
    %v62 = vld [vmem:[%s2] sm:$0xff]
    %v63 = vld [vmem:[%s2 + $0x8] sm:$0x1]
    %v64 = vrot.slane %v58, 7
    %v65 = vrot.slane %v59, 7
    %v66 = vrot.slane %v60, 7
    %v67 = vrot.slane %v61, 7
    %vm68 = vcmp.lt.s32.totalorder %v38, 1
    %v69 = vsel %vm68, %v66, %v67
    %v70 = vsel %vm68, %v65, %v66
    %v71 = vsel %vm68, %v64, %v65
    %v72 = vsel %vm68, %v67, %v64
    %73 = vrot.lane.b32.xlu0 %v72, 8
    %v74 = vpop.permute.xlu0 %73
    %75 = vrot.lane.b32.xlu0 %v71, 8
    %v76 = vpop.permute.xlu0 %75
    %77 = vrot.lane.b32.xlu0 %v70, 8
    %v78 = vpop.permute.xlu0 %77
    %79 = vrot.lane.b32.xlu0 %v69, 8
    %v80 = vpop.permute.xlu0 %79
    %vm81 = vmand %vm48, %vm56
    %vm82 = vmand %vm49, %vm56
    %vm83 = vmand %vm50, %vm56
    %vm84 = vmand %vm51, %vm56
    %v85 = vsel %vm81, %v74, 0.0
    %v86 = vsel %vm82, %v76, 0.0
    %v87 = vsel %vm83, %v78, 0.0
    %v88 = vsel %vm84, %v80, 0.0
    %v89 = vlaneseq
    %v90 = vshrl.u32 %v89, 7
    %v91 = vsub.s32 0, %v90
    %v92 = vrot.slane %v62, %v91
    %v93 = vmul.f32 %v85, %v92
    %v94 = vmul.f32 %v86, %v92
    %v95 = vmul.f32 %v87, %v92
    %v96 = vmul.f32 %v88, %v92
    %v97 = vsel %vm48, %v72, 0.0
    %v98 = vsel %vm49, %v71, 0.0
    %v99 = vsel %vm50, %v70, 0.0
    %v100 = vsel %vm51, %v69, 0.0
    %v101 = vlaneseq
    %v102 = vshrl.u32 %v101, 7
    %v103 = vsub.s32 1, %v102
    %v104 = vrot.slane %v62, %v103
    %v105 = vmul.f32 %v97, %v104
    %v106 = vmul.f32 %v98, %v104
    %v107 = vmul.f32 %v99, %v104
    %v108 = vmul.f32 %v100, %v104
    %v109 = vadd.f32 %v93, %v105
    %v110 = vadd.f32 %v94, %v106
    %v111 = vadd.f32 %v95, %v107
    %v112 = vadd.f32 %v96, %v108
    %113 = vrot.lane.b32.xlu0 %v72, 120
    %v114 = vpop.permute.xlu0 %113
    %115 = vrot.lane.b32.xlu0 %v71, 120
    %v116 = vpop.permute.xlu0 %115
    %117 = vrot.lane.b32.xlu0 %v70, 120
    %v118 = vpop.permute.xlu0 %117
    %119 = vrot.lane.b32.xlu0 %v69, 120
    %v120 = vpop.permute.xlu0 %119
    %vm121 = vmand %vm48, %vm57
    %vm122 = vmand %vm49, %vm57
    %vm123 = vmand %vm50, %vm57
    %vm124 = vmand %vm51, %vm57
    %v125 = vsel %vm121, %v114, 0.0
    %v126 = vsel %vm122, %v116, 0.0
    %v127 = vsel %vm123, %v118, 0.0
    %v128 = vsel %vm124, %v120, 0.0
    %v129 = vlaneseq
    %v130 = vshrl.u32 %v129, 7
    %v131 = vsub.s32 2, %v130
    %v132 = vrot.slane %v62, %v131
    %v133 = vmul.f32 %v125, %v132
    %v134 = vmul.f32 %v126, %v132
    %v135 = vmul.f32 %v127, %v132
    %v136 = vmul.f32 %v128, %v132
    %v137 = vadd.f32 %v109, %v133
    %v138 = vadd.f32 %v110, %v134
    %v139 = vadd.f32 %v111, %v135
    %v140 = vadd.f32 %v112, %v136
    %141 = vrot.lane.b32.xlu0 %v58, 8
    %v142 = vpop.permute.xlu0 %141
    %143 = vrot.lane.b32.xlu0 %v59, 8
    %v144 = vpop.permute.xlu0 %143
    %145 = vrot.lane.b32.xlu0 %v60, 8
    %v146 = vpop.permute.xlu0 %145
    %147 = vrot.lane.b32.xlu0 %v61, 8
    %v148 = vpop.permute.xlu0 %147
    %v149 = vsel %vm56, %v142, 0.0
    %v150 = vsel %vm56, %v144, 0.0
    %v151 = vsel %vm56, %v146, 0.0
    %v152 = vsel %vm56, %v148, 0.0
    %v153 = vlaneseq
    %v154 = vshrl.u32 %v153, 7
    %v155 = vsub.s32 3, %v154
    %v156 = vrot.slane %v62, %v155
    %v157 = vmul.f32 %v149, %v156
    %v158 = vmul.f32 %v150, %v156
    %v159 = vmul.f32 %v151, %v156
    %v160 = vmul.f32 %v152, %v156
    %v161 = vadd.f32 %v137, %v157
    %v162 = vadd.f32 %v138, %v158
    %v163 = vadd.f32 %v139, %v159
    %v164 = vadd.f32 %v140, %v160
    %v165 = vlaneseq
    %v166 = vshrl.u32 %v165, 7
    %v167 = vsub.s32 4, %v166
    %v168 = vrot.slane %v62, %v167
    %v169 = vmul.f32 %v58, %v168
    %v170 = vmul.f32 %v59, %v168
    %v171 = vmul.f32 %v60, %v168
    %v172 = vmul.f32 %v61, %v168
    %v173 = vadd.f32 %v161, %v169
    %v174 = vadd.f32 %v162, %v170
    %v175 = vadd.f32 %v163, %v171
    %v176 = vadd.f32 %v164, %v172
    %177 = vrot.lane.b32.xlu0 %v58, 120
    %v178 = vpop.permute.xlu0 %177
    %179 = vrot.lane.b32.xlu0 %v59, 120
    %v180 = vpop.permute.xlu0 %179
    %181 = vrot.lane.b32.xlu0 %v60, 120
    %v182 = vpop.permute.xlu0 %181
    %183 = vrot.lane.b32.xlu0 %v61, 120
    %v184 = vpop.permute.xlu0 %183
    %v185 = vsel %vm57, %v178, 0.0
    %v186 = vsel %vm57, %v180, 0.0
    %v187 = vsel %vm57, %v182, 0.0
    %v188 = vsel %vm57, %v184, 0.0
    %v189 = vlaneseq
    %v190 = vshrl.u32 %v189, 7
    %v191 = vsub.s32 5, %v190
    %v192 = vrot.slane %v62, %v191
    %v193 = vmul.f32 %v185, %v192
    %v194 = vmul.f32 %v186, %v192
    %v195 = vmul.f32 %v187, %v192
    %v196 = vmul.f32 %v188, %v192
    %v197 = vadd.f32 %v173, %v193
    %v198 = vadd.f32 %v174, %v194
    %v199 = vadd.f32 %v175, %v195
    %v200 = vadd.f32 %v176, %v196
    %v201 = vrot.slane %v58, 1
    %v202 = vrot.slane %v59, 1
    %v203 = vrot.slane %v60, 1
    %v204 = vrot.slane %v61, 1
    %vm205 = vcmp.lt.s32.totalorder %v38, 7
    %v206 = vsel %vm205, %v203, %v204
    %v207 = vsel %vm205, %v202, %v203
    %v208 = vsel %vm205, %v201, %v202
    %v209 = vsel %vm205, %v204, %v201
    %210 = vrot.lane.b32.xlu0 %v208, 8
    %v211 = vpop.permute.xlu0 %210
    %212 = vrot.lane.b32.xlu0 %v207, 8
    %v213 = vpop.permute.xlu0 %212
    %214 = vrot.lane.b32.xlu0 %v206, 8
    %v215 = vpop.permute.xlu0 %214
    %216 = vrot.lane.b32.xlu0 %v209, 8
    %v217 = vpop.permute.xlu0 %216
    %vm218 = vmand %vm52, %vm56
    %vm219 = vmand %vm53, %vm56
    %vm220 = vmand %vm54, %vm56
    %vm221 = vmand %vm55, %vm56
    %v222 = vsel %vm218, %v211, 0.0
    %v223 = vsel %vm219, %v213, 0.0
    %v224 = vsel %vm220, %v215, 0.0
    %v225 = vsel %vm221, %v217, 0.0
    %v226 = vlaneseq
    %v227 = vshrl.u32 %v226, 7
    %v228 = vsub.s32 6, %v227
    %v229 = vrot.slane %v62, %v228
    %v230 = vmul.f32 %v222, %v229
    %v231 = vmul.f32 %v223, %v229
    %v232 = vmul.f32 %v224, %v229
    %v233 = vmul.f32 %v225, %v229
    %v234 = vadd.f32 %v197, %v230
    %v235 = vadd.f32 %v198, %v231
    %v236 = vadd.f32 %v199, %v232
    %v237 = vadd.f32 %v200, %v233
    %v238 = vsel %vm52, %v208, 0.0
    %v239 = vsel %vm53, %v207, 0.0
    %v240 = vsel %vm54, %v206, 0.0
    %v241 = vsel %vm55, %v209, 0.0
    %v242 = vlaneseq
    %v243 = vshrl.u32 %v242, 7
    %v244 = vsub.s32 7, %v243
    %v245 = vrot.slane %v62, %v244
    %v246 = vmul.f32 %v238, %v245
    %v247 = vmul.f32 %v239, %v245
    %v248 = vmul.f32 %v240, %v245
    %v249 = vmul.f32 %v241, %v245
    %v250 = vadd.f32 %v234, %v246
    %v251 = vadd.f32 %v235, %v247
    %v252 = vadd.f32 %v236, %v248
    %v253 = vadd.f32 %v237, %v249
    %254 = vrot.lane.b32.xlu0 %v208, 120
    %v255 = vpop.permute.xlu0 %254
    %256 = vrot.lane.b32.xlu0 %v207, 120
    %v257 = vpop.permute.xlu0 %256
    %258 = vrot.lane.b32.xlu0 %v206, 120
    %v259 = vpop.permute.xlu0 %258
    %260 = vrot.lane.b32.xlu0 %v209, 120
    %v261 = vpop.permute.xlu0 %260
    %vm262 = vmand %vm52, %vm57
    %vm263 = vmand %vm53, %vm57
    %vm264 = vmand %vm54, %vm57
    %vm265 = vmand %vm55, %vm57
    %v266 = vsel %vm262, %v255, 0.0
    %v267 = vsel %vm263, %v257, 0.0
    %v268 = vsel %vm264, %v259, 0.0
    %v269 = vsel %vm265, %v261, 0.0
    %v270 = vlaneseq
    %v271 = vshrl.u32 %v270, 7
    %v272 = vsub.s32 0, %v271
    %v273 = vrot.slane %v63, %v272
    %v274 = vmul.f32 %v266, %v273
    %v275 = vmul.f32 %v267, %v273
    %v276 = vmul.f32 %v268, %v273
    %v277 = vmul.f32 %v269, %v273
    %v278 = vadd.f32 %v250, %v274
    %v279 = vadd.f32 %v251, %v275
    %v280 = vadd.f32 %v252, %v276
    %v281 = vadd.f32 %v253, %v277
    %v282 = vld [vmem:[#allocation2] sm:$0xff]
    %v283 = vld [vmem:[#allocation2 + $0x8] sm:$0xff]
    %v284 = vld [vmem:[#allocation2 + $0x10] sm:$0xff]
    %v285 = vld [vmem:[#allocation2 + $0x18] sm:$0xff]
    %v286 = vld [vmem:[#allocation2 + $0x20] sm:$0xff]
    %v287 = vld [vmem:[#allocation2 + $0x28] sm:$0xff]
    %v288 = vld [vmem:[#allocation2 + $0x30] sm:$0xff]
    %v289 = vld [vmem:[#allocation2 + $0x38] sm:$0xff]
    %v290 = vld [vmem:[#allocation2 + $0x40] sm:$0xff]
    %v291 = vld [vmem:[#allocation2 + $0x48] sm:$0xff]
    %v292 = vld [vmem:[#allocation2 + $0x50] sm:$0xff]
    %v293 = vld [vmem:[#allocation2 + $0x58] sm:$0xff]
    %v294 = vld [vmem:[#allocation2 + $0x60] sm:$0xff]
    %v295 = vld [vmem:[#allocation2 + $0x68] sm:$0xff]
    %v296 = vld [vmem:[#allocation2 + $0x70] sm:$0xff]
    %v297 = vld [vmem:[#allocation2 + $0x78] sm:$0xff]
    %v298 = vlaneseq
    %v299 = vshrl.u32 %v298, 7
    %v300 = vsub.s32 0, %v299
    %v301 = vrot.slane %v36, %v300
    %302 = vmatprep.subr.mxu0 0.0
    %303 = vmatpush1.msra.mxu0 %v297
    %304 = vmatprep.subr.mxu0 0.0
    %305 = vmatpush1.msra.mxu0 %v296
    %306 = vmatprep.subr.mxu0 0.0
    %307 = vmatpush1.msra.mxu0 %v295
    %308 = vmatprep.subr.mxu0 0.0
    %309 = vmatpush1.msra.mxu0 %v294
    %310 = vmatprep.subr.mxu0 0.0
    %311 = vmatpush1.msra.mxu0 %v293
    %312 = vmatprep.subr.mxu0 0.0
    %313 = vmatpush1.msra.mxu0 %v292
    %314 = vmatprep.subr.mxu0 0.0
    %315 = vmatpush1.msra.mxu0 %v291
    %316 = vmatprep.subr.mxu0 0.0
    %317 = vmatpush1.msra.mxu0 %v290
    %318 = vmatprep.subr.mxu0 0.0
    %319 = vmatpush1.msra.mxu0 %v289
    %320 = vmatprep.subr.mxu0 0.0
    %321 = vmatpush1.msra.mxu0 %v288
    %322 = vmatprep.subr.mxu0 0.0
    %323 = vmatpush1.msra.mxu0 %v287
    %324 = vmatprep.subr.mxu0 0.0
    %325 = vmatpush1.msra.mxu0 %v286
    %326 = vmatprep.subr.mxu0 0.0
    %327 = vmatpush1.msra.mxu0 %v285
    %328 = vmatprep.subr.mxu0 0.0
    %329 = vmatpush1.msra.mxu0 %v284
    %330 = vmatprep.subr.mxu0 0.0
    %331 = vmatpush1.msra.mxu0 %v283
    %332 = vmatprep.subr.mxu0 0.0
    %333 = vmatpush1.msra.mxu0 %v282
    %334 = vmatprep.subr.mxu0 0.0
    %335 = vmatpush2.msra.mxu0 0.0
    %336 = vmatprep.subr.mxu0 0.0
    %337 = vmatpush2.msra.mxu0 0.0
    %338 = vmatprep.subr.mxu0 0.0
    %339 = vmatpush2.msra.mxu0 0.0
    %340 = vmatprep.subr.mxu0 0.0
    %341 = vmatpush2.msra.mxu0 0.0
    %342 = vmatprep.subr.mxu0 0.0
    %343 = vmatpush2.msra.mxu0 0.0
    %344 = vmatprep.subr.mxu0 0.0
    %345 = vmatpush2.msra.mxu0 0.0
    %346 = vmatprep.subr.mxu0 0.0
    %347 = vmatpush2.msra.mxu0 0.0
    %348 = vmatprep.subr.mxu0 0.0
    %349 = vmatpush2.msra.mxu0 0.0
    %350 = vmatprep.subr.mxu0 0.0
    %351 = vmatpush2.msra.mxu0 0.0
    %352 = vmatprep.subr.mxu0 0.0
    %353 = vmatpush2.msra.mxu0 0.0
    %354 = vmatprep.subr.mxu0 0.0
    %355 = vmatpush2.msra.mxu0 0.0
    %356 = vmatprep.subr.mxu0 0.0
    %357 = vmatpush2.msra.mxu0 0.0
    %358 = vmatprep.subr.mxu0 0.0
    %359 = vmatpush2.msra.mxu0 0.0
    %360 = vmatprep.subr.mxu0 0.0
    %361 = vmatpush2.msra.mxu0 0.0
    %362 = vmatprep.subr.mxu0 0.0
    %363 = vmatpush2.msra.mxu0 0.0
    %364 = vmatprep.subr.mxu0 0.0
    %365 = vmatpush2.msra.mxu0 0.0
    %366 = vmatprep.mubr.f32.mxu0 0.0
    %367 = vmatmul.mubr.f32.gmra.mxu0 %v278
    %v368 = vpop.f32.mrf.mxu0
    %v369 = vadd.f32 %v301, %v368
    %v370 = vpop.f32.mrf.mxu0
    %371 = vmatprep.mubr.f32.mxu0 0.0
    %372 = vmatmul.mubr.f32.gmra.mxu0 %v279
    %v373 = vpop.f32.mrf.mxu0
    %v374 = vadd.f32 %v301, %v373
    %v375 = vpop.f32.mrf.mxu0
    %376 = vmatprep.mubr.f32.mxu0 0.0
    %377 = vmatmul.mubr.f32.gmra.mxu0 %v280
    %v378 = vpop.f32.mrf.mxu0
    %v379 = vadd.f32 %v301, %v378
    %v380 = vpop.f32.mrf.mxu0
    %381 = vmatprep.mubr.f32.mxu0 0.0
    %382 = vmatmul.mubr.f32.gmra.mxu0 %v281
    %v383 = vpop.f32.mrf.mxu0
    %v384 = vadd.f32 %v301, %v383
    %v385 = vpop.f32.mrf.mxu0
    %386 = vdwg.mxu0
    %v387 = vmax.f32 %v369, 0.0
    %v388 = vmax.f32 %v374, 0.0
    %v389 = vmax.f32 %v379, 0.0
    %v390 = vmax.f32 %v384, 0.0
    %s391 = scalar_lea.vmem %s2, 16
    %v392 = vld [vmem:[%s391] sm:$0xff]
    %v393 = vld [vmem:[%s391 + $0x8] sm:$0x1]
    %v394 = vrot.slane %v387, 7
    %v395 = vrot.slane %v388, 7
    %v396 = vrot.slane %v389, 7
    %v397 = vrot.slane %v390, 7
    %v398 = vsel %vm68, %v396, %v397
    %v399 = vsel %vm68, %v395, %v396
    %v400 = vsel %vm68, %v394, %v395
    %v401 = vsel %vm68, %v397, %v394
    %402 = vrot.lane.b32.xlu0 %v401, 8
    %v403 = vpop.permute.xlu0 %402
    %404 = vrot.lane.b32.xlu0 %v400, 8
    %v405 = vpop.permute.xlu0 %404
    %406 = vrot.lane.b32.xlu0 %v399, 8
    %v407 = vpop.permute.xlu0 %406
    %408 = vrot.lane.b32.xlu0 %v398, 8
    %v409 = vpop.permute.xlu0 %408
    %v410 = vsel %vm81, %v403, 0.0
    %v411 = vsel %vm82, %v405, 0.0
    %v412 = vsel %vm83, %v407, 0.0
    %v413 = vsel %vm84, %v409, 0.0
    %v414 = vlaneseq
    %v415 = vshrl.u32 %v414, 7
    %v416 = vsub.s32 0, %v415
    %v417 = vrot.slane %v392, %v416
    %v418 = vmul.f32 %v410, %v417
    %v419 = vmul.f32 %v411, %v417
    %v420 = vmul.f32 %v412, %v417
    %v421 = vmul.f32 %v413, %v417
    %v422 = vsel %vm48, %v401, 0.0
    %v423 = vsel %vm49, %v400, 0.0
    %v424 = vsel %vm50, %v399, 0.0
    %v425 = vsel %vm51, %v398, 0.0
    %v426 = vlaneseq
    %v427 = vshrl.u32 %v426, 7
    %v428 = vsub.s32 1, %v427
    %v429 = vrot.slane %v392, %v428
    %v430 = vmul.f32 %v422, %v429
    %v431 = vmul.f32 %v423, %v429
    %v432 = vmul.f32 %v424, %v429
    %v433 = vmul.f32 %v425, %v429
    %v434 = vadd.f32 %v418, %v430
    %v435 = vadd.f32 %v419, %v431
    %v436 = vadd.f32 %v420, %v432
    %v437 = vadd.f32 %v421, %v433
    %438 = vrot.lane.b32.xlu0 %v401, 120
    %v439 = vpop.permute.xlu0 %438
    %440 = vrot.lane.b32.xlu0 %v400, 120
    %v441 = vpop.permute.xlu0 %440
    %442 = vrot.lane.b32.xlu0 %v399, 120
    %v443 = vpop.permute.xlu0 %442
    %444 = vrot.lane.b32.xlu0 %v398, 120
    %v445 = vpop.permute.xlu0 %444
    %v446 = vsel %vm121, %v439, 0.0
    %v447 = vsel %vm122, %v441, 0.0
    %v448 = vsel %vm123, %v443, 0.0
    %v449 = vsel %vm124, %v445, 0.0
    %v450 = vlaneseq
    %v451 = vshrl.u32 %v450, 7
    %v452 = vsub.s32 2, %v451
    %v453 = vrot.slane %v392, %v452
    %v454 = vmul.f32 %v446, %v453
    %v455 = vmul.f32 %v447, %v453
    %v456 = vmul.f32 %v448, %v453
    %v457 = vmul.f32 %v449, %v453
    %v458 = vadd.f32 %v434, %v454
    %v459 = vadd.f32 %v435, %v455
    %v460 = vadd.f32 %v436, %v456
    %v461 = vadd.f32 %v437, %v457
    %462 = vrot.lane.b32.xlu0 %v387, 8
    %v463 = vpop.permute.xlu0 %462
    %464 = vrot.lane.b32.xlu0 %v388, 8
    %v465 = vpop.permute.xlu0 %464
    %466 = vrot.lane.b32.xlu0 %v389, 8
    %v467 = vpop.permute.xlu0 %466
    %468 = vrot.lane.b32.xlu0 %v390, 8
    %v469 = vpop.permute.xlu0 %468
    %v470 = vsel %vm56, %v463, 0.0
    %v471 = vsel %vm56, %v465, 0.0
    %v472 = vsel %vm56, %v467, 0.0
    %v473 = vsel %vm56, %v469, 0.0
    %v474 = vlaneseq
    %v475 = vshrl.u32 %v474, 7
    %v476 = vsub.s32 3, %v475
    %v477 = vrot.slane %v392, %v476
    %v478 = vmul.f32 %v470, %v477
    %v479 = vmul.f32 %v471, %v477
    %v480 = vmul.f32 %v472, %v477
    %v481 = vmul.f32 %v473, %v477
    %v482 = vadd.f32 %v458, %v478
    %v483 = vadd.f32 %v459, %v479
    %v484 = vadd.f32 %v460, %v480
    %v485 = vadd.f32 %v461, %v481
    %v486 = vlaneseq
    %v487 = vshrl.u32 %v486, 7
    %v488 = vsub.s32 4, %v487
    %v489 = vrot.slane %v392, %v488
    %v490 = vmul.f32 %v387, %v489
    %v491 = vmul.f32 %v388, %v489
    %v492 = vmul.f32 %v389, %v489
    %v493 = vmul.f32 %v390, %v489
    %v494 = vadd.f32 %v482, %v490
    %v495 = vadd.f32 %v483, %v491
    %v496 = vadd.f32 %v484, %v492
    %v497 = vadd.f32 %v485, %v493
    %498 = vrot.lane.b32.xlu0 %v387, 120
    %v499 = vpop.permute.xlu0 %498
    %500 = vrot.lane.b32.xlu0 %v388, 120
    %v501 = vpop.permute.xlu0 %500
    %502 = vrot.lane.b32.xlu0 %v389, 120
    %v503 = vpop.permute.xlu0 %502
    %504 = vrot.lane.b32.xlu0 %v390, 120
    %v505 = vpop.permute.xlu0 %504
    %v506 = vsel %vm57, %v499, 0.0
    %v507 = vsel %vm57, %v501, 0.0
    %v508 = vsel %vm57, %v503, 0.0
    %v509 = vsel %vm57, %v505, 0.0
    %v510 = vlaneseq
    %v511 = vshrl.u32 %v510, 7
    %v512 = vsub.s32 5, %v511
    %v513 = vrot.slane %v392, %v512
    %v514 = vmul.f32 %v506, %v513
    %v515 = vmul.f32 %v507, %v513
    %v516 = vmul.f32 %v508, %v513
    %v517 = vmul.f32 %v509, %v513
    %v518 = vadd.f32 %v494, %v514
    %v519 = vadd.f32 %v495, %v515
    %v520 = vadd.f32 %v496, %v516
    %v521 = vadd.f32 %v497, %v517
    %v522 = vrot.slane %v387, 1
    %v523 = vrot.slane %v388, 1
    %v524 = vrot.slane %v389, 1
    %v525 = vrot.slane %v390, 1
    %v526 = vsel %vm205, %v524, %v525
    %v527 = vsel %vm205, %v523, %v524
    %v528 = vsel %vm205, %v522, %v523
    %v529 = vsel %vm205, %v525, %v522
    %530 = vrot.lane.b32.xlu0 %v528, 8
    %v531 = vpop.permute.xlu0 %530
    %532 = vrot.lane.b32.xlu0 %v527, 8
    %v533 = vpop.permute.xlu0 %532
    %534 = vrot.lane.b32.xlu0 %v526, 8
    %v535 = vpop.permute.xlu0 %534
    %536 = vrot.lane.b32.xlu0 %v529, 8
    %v537 = vpop.permute.xlu0 %536
    %v538 = vsel %vm218, %v531, 0.0
    %v539 = vsel %vm219, %v533, 0.0
    %v540 = vsel %vm220, %v535, 0.0
    %v541 = vsel %vm221, %v537, 0.0
    %v542 = vlaneseq
    %v543 = vshrl.u32 %v542, 7
    %v544 = vsub.s32 6, %v543
    %v545 = vrot.slane %v392, %v544
    %v546 = vmul.f32 %v538, %v545
    %v547 = vmul.f32 %v539, %v545
    %v548 = vmul.f32 %v540, %v545
    %v549 = vmul.f32 %v541, %v545
    %v550 = vadd.f32 %v518, %v546
    %v551 = vadd.f32 %v519, %v547
    %v552 = vadd.f32 %v520, %v548
    %v553 = vadd.f32 %v521, %v549
    %v554 = vsel %vm52, %v528, 0.0
    %v555 = vsel %vm53, %v527, 0.0
    %v556 = vsel %vm54, %v526, 0.0
    %v557 = vsel %vm55, %v529, 0.0
    %v558 = vlaneseq
    %v559 = vshrl.u32 %v558, 7
    %v560 = vsub.s32 7, %v559
    %v561 = vrot.slane %v392, %v560
    %v562 = vmul.f32 %v554, %v561
    %v563 = vmul.f32 %v555, %v561
    %v564 = vmul.f32 %v556, %v561
    %v565 = vmul.f32 %v557, %v561
    %v566 = vadd.f32 %v550, %v562
    %v567 = vadd.f32 %v551, %v563
    %v568 = vadd.f32 %v552, %v564
    %v569 = vadd.f32 %v553, %v565
    %570 = vrot.lane.b32.xlu0 %v528, 120
    %v571 = vpop.permute.xlu0 %570
    %572 = vrot.lane.b32.xlu0 %v527, 120
    %v573 = vpop.permute.xlu0 %572
    %574 = vrot.lane.b32.xlu0 %v526, 120
    %v575 = vpop.permute.xlu0 %574
    %576 = vrot.lane.b32.xlu0 %v529, 120
    %v577 = vpop.permute.xlu0 %576
    %v578 = vsel %vm262, %v571, 0.0
    %v579 = vsel %vm263, %v573, 0.0
    %v580 = vsel %vm264, %v575, 0.0
    %v581 = vsel %vm265, %v577, 0.0
    %v582 = vlaneseq
    %v583 = vshrl.u32 %v582, 7
    %v584 = vsub.s32 0, %v583
    %v585 = vrot.slane %v393, %v584
    %v586 = vmul.f32 %v578, %v585
    %v587 = vmul.f32 %v579, %v585
    %v588 = vmul.f32 %v580, %v585
    %v589 = vmul.f32 %v581, %v585
    %v590 = vadd.f32 %v566, %v586
    %v591 = vadd.f32 %v567, %v587
    %v592 = vadd.f32 %v568, %v588
    %v593 = vadd.f32 %v569, %v589
    %s594 = scalar_lea.vmem [#allocation2], 128
    %v595 = vld [vmem:[%s594] sm:$0xff]
    %v596 = vld [vmem:[%s594 + $0x8] sm:$0xff]
    %v597 = vld [vmem:[%s594 + $0x10] sm:$0xff]
    %v598 = vld [vmem:[%s594 + $0x18] sm:$0xff]
    %v599 = vld [vmem:[%s594 + $0x20] sm:$0xff]
    %v600 = vld [vmem:[%s594 + $0x28] sm:$0xff]
    %v601 = vld [vmem:[%s594 + $0x30] sm:$0xff]
    %v602 = vld [vmem:[%s594 + $0x38] sm:$0xff]
    %v603 = vld [vmem:[%s594 + $0x40] sm:$0xff]
    %v604 = vld [vmem:[%s594 + $0x48] sm:$0xff]
    %v605 = vld [vmem:[%s594 + $0x50] sm:$0xff]
    %v606 = vld [vmem:[%s594 + $0x58] sm:$0xff]
    %v607 = vld [vmem:[%s594 + $0x60] sm:$0xff]
    %v608 = vld [vmem:[%s594 + $0x68] sm:$0xff]
    %v609 = vld [vmem:[%s594 + $0x70] sm:$0xff]
    %v610 = vld [vmem:[%s594 + $0x78] sm:$0xff]
    %s611 = scalar_lea.vmem [#allocation2], 256
    %v612 = vld [vmem:[%s611] sm:$0xff]
    %v613 = vld [vmem:[%s611 + $0x8] sm:$0xff]
    %v614 = vld [vmem:[%s611 + $0x10] sm:$0xff]
    %v615 = vld [vmem:[%s611 + $0x18] sm:$0xff]
    %v616 = vld [vmem:[%s611 + $0x20] sm:$0xff]
    %v617 = vld [vmem:[%s611 + $0x28] sm:$0xff]
    %v618 = vld [vmem:[%s611 + $0x30] sm:$0xff]
    %v619 = vld [vmem:[%s611 + $0x38] sm:$0xff]
    %v620 = vld [vmem:[%s611 + $0x40] sm:$0xff]
    %v621 = vld [vmem:[%s611 + $0x48] sm:$0xff]
    %v622 = vld [vmem:[%s611 + $0x50] sm:$0xff]
    %v623 = vld [vmem:[%s611 + $0x58] sm:$0xff]
    %v624 = vld [vmem:[%s611 + $0x60] sm:$0xff]
    %v625 = vld [vmem:[%s611 + $0x68] sm:$0xff]
    %v626 = vld [vmem:[%s611 + $0x70] sm:$0xff]
    %v627 = vld [vmem:[%s611 + $0x78] sm:$0xff]
    %628 = vmatprep.subr.mxu0 0.0
    %629 = vmatpush1.msra.mxu0 %v627
    %630 = vmatprep.subr.mxu0 0.0
    %631 = vmatpush1.msra.mxu0 %v626
    %632 = vmatprep.subr.mxu0 0.0
    %633 = vmatpush1.msra.mxu0 %v625
    %634 = vmatprep.subr.mxu0 0.0
    %635 = vmatpush1.msra.mxu0 %v624
    %636 = vmatprep.subr.mxu0 0.0
    %637 = vmatpush1.msra.mxu0 %v623
    %638 = vmatprep.subr.mxu0 0.0
    %639 = vmatpush1.msra.mxu0 %v622
    %640 = vmatprep.subr.mxu0 0.0
    %641 = vmatpush1.msra.mxu0 %v621
    %642 = vmatprep.subr.mxu0 0.0
    %643 = vmatpush1.msra.mxu0 %v620
    %644 = vmatprep.subr.mxu0 0.0
    %645 = vmatpush1.msra.mxu0 %v619
    %646 = vmatprep.subr.mxu0 0.0
    %647 = vmatpush1.msra.mxu0 %v618
    %648 = vmatprep.subr.mxu0 0.0
    %649 = vmatpush1.msra.mxu0 %v617
    %650 = vmatprep.subr.mxu0 0.0
    %651 = vmatpush1.msra.mxu0 %v616
    %652 = vmatprep.subr.mxu0 0.0
    %653 = vmatpush1.msra.mxu0 %v615
    %654 = vmatprep.subr.mxu0 0.0
    %655 = vmatpush1.msra.mxu0 %v614
    %656 = vmatprep.subr.mxu0 0.0
    %657 = vmatpush1.msra.mxu0 %v613
    %658 = vmatprep.subr.mxu0 0.0
    %659 = vmatpush1.msra.mxu0 %v612
    %660 = vmatprep.subr.mxu0 0.0
    %661 = vmatpush2.msra.mxu0 0.0
    %662 = vmatprep.subr.mxu0 0.0
    %663 = vmatpush2.msra.mxu0 0.0
    %664 = vmatprep.subr.mxu0 0.0
    %665 = vmatpush2.msra.mxu0 0.0
    %666 = vmatprep.subr.mxu0 0.0
    %667 = vmatpush2.msra.mxu0 0.0
    %668 = vmatprep.subr.mxu0 0.0
    %669 = vmatpush2.msra.mxu0 0.0
    %670 = vmatprep.subr.mxu0 0.0
    %671 = vmatpush2.msra.mxu0 0.0
    %672 = vmatprep.subr.mxu0 0.0
    %673 = vmatpush2.msra.mxu0 0.0
    %674 = vmatprep.subr.mxu0 0.0
    %675 = vmatpush2.msra.mxu0 0.0
    %676 = vmatprep.subr.mxu0 0.0
    %677 = vmatpush2.msra.mxu0 0.0
    %678 = vmatprep.subr.mxu0 0.0
    %679 = vmatpush2.msra.mxu0 0.0
    %680 = vmatprep.subr.mxu0 0.0
    %681 = vmatpush2.msra.mxu0 0.0
    %682 = vmatprep.subr.mxu0 0.0
    %683 = vmatpush2.msra.mxu0 0.0
    %684 = vmatprep.subr.mxu0 0.0
    %685 = vmatpush2.msra.mxu0 0.0
    %686 = vmatprep.subr.mxu0 0.0
    %687 = vmatpush2.msra.mxu0 0.0
    %688 = vmatprep.subr.mxu0 0.0
    %689 = vmatpush2.msra.mxu0 0.0
    %690 = vmatprep.subr.mxu0 0.0
    %691 = vmatpush2.msra.mxu0 0.0
    %692 = vmatprep.mubr.f32.mxu0 0.0
    %693 = vmatmul.mubr.f32.gmra.mxu0 %v32
    %v694 = vpop.f32.mrf.mxu0
    %v695 = vadd.f32 0.0, %v694
    %v696 = vpop.f32.mrf.mxu0
    %697 = vmatprep.mubr.f32.mxu0 0.0
    %698 = vmatmul.mubr.f32.gmra.mxu0 %v33
    %v699 = vpop.f32.mrf.mxu0
    %v700 = vadd.f32 0.0, %v699
    %v701 = vpop.f32.mrf.mxu0
    %702 = vmatprep.mubr.f32.mxu0 0.0
    %703 = vmatmul.mubr.f32.gmra.mxu0 %v34
    %v704 = vpop.f32.mrf.mxu0
    %v705 = vadd.f32 0.0, %v704
    %v706 = vpop.f32.mrf.mxu0
    %707 = vmatprep.mubr.f32.mxu0 0.0
    %708 = vmatmul.mubr.f32.gmra.mxu0 %v35
    %v709 = vpop.f32.mrf.mxu0
    %v710 = vadd.f32 0.0, %v709
    %v711 = vpop.f32.mrf.mxu0
    %712 = vdwg.mxu0
    %713 = vmatprep.subr.mxu0 0.0
    %714 = vmatpush1.msra.mxu0 %v610
    %715 = vmatprep.subr.mxu0 0.0
    %716 = vmatpush1.msra.mxu0 %v609
    %717 = vmatprep.subr.mxu0 0.0
    %718 = vmatpush1.msra.mxu0 %v608
    %719 = vmatprep.subr.mxu0 0.0
    %720 = vmatpush1.msra.mxu0 %v607
    %721 = vmatprep.subr.mxu0 0.0
    %722 = vmatpush1.msra.mxu0 %v606
    %723 = vmatprep.subr.mxu0 0.0
    %724 = vmatpush1.msra.mxu0 %v605
    %725 = vmatprep.subr.mxu0 0.0
    %726 = vmatpush1.msra.mxu0 %v604
    %727 = vmatprep.subr.mxu0 0.0
    %728 = vmatpush1.msra.mxu0 %v603
    %729 = vmatprep.subr.mxu0 0.0
    %730 = vmatpush1.msra.mxu0 %v602
    %731 = vmatprep.subr.mxu0 0.0
    %732 = vmatpush1.msra.mxu0 %v601
    %733 = vmatprep.subr.mxu0 0.0
    %734 = vmatpush1.msra.mxu0 %v600
    %735 = vmatprep.subr.mxu0 0.0
    %736 = vmatpush1.msra.mxu0 %v599
    %737 = vmatprep.subr.mxu0 0.0
    %738 = vmatpush1.msra.mxu0 %v598
    %739 = vmatprep.subr.mxu0 0.0
    %740 = vmatpush1.msra.mxu0 %v597
    %741 = vmatprep.subr.mxu0 0.0
    %742 = vmatpush1.msra.mxu0 %v596
    %743 = vmatprep.subr.mxu0 0.0
    %744 = vmatpush1.msra.mxu0 %v595
    %745 = vmatprep.subr.mxu0 0.0
    %746 = vmatpush2.msra.mxu0 0.0
    %747 = vmatprep.subr.mxu0 0.0
    %748 = vmatpush2.msra.mxu0 0.0
    %749 = vmatprep.subr.mxu0 0.0
    %750 = vmatpush2.msra.mxu0 0.0
    %751 = vmatprep.subr.mxu0 0.0
    %752 = vmatpush2.msra.mxu0 0.0
    %753 = vmatprep.subr.mxu0 0.0
    %754 = vmatpush2.msra.mxu0 0.0
    %755 = vmatprep.subr.mxu0 0.0
    %756 = vmatpush2.msra.mxu0 0.0
    %757 = vmatprep.subr.mxu0 0.0
    %758 = vmatpush2.msra.mxu0 0.0
    %759 = vmatprep.subr.mxu0 0.0
    %760 = vmatpush2.msra.mxu0 0.0
    %761 = vmatprep.subr.mxu0 0.0
    %762 = vmatpush2.msra.mxu0 0.0
    %763 = vmatprep.subr.mxu0 0.0
    %764 = vmatpush2.msra.mxu0 0.0
    %765 = vmatprep.subr.mxu0 0.0
    %766 = vmatpush2.msra.mxu0 0.0
    %767 = vmatprep.subr.mxu0 0.0
    %768 = vmatpush2.msra.mxu0 0.0
    %769 = vmatprep.subr.mxu0 0.0
    %770 = vmatpush2.msra.mxu0 0.0
    %771 = vmatprep.subr.mxu0 0.0
    %772 = vmatpush2.msra.mxu0 0.0
    %773 = vmatprep.subr.mxu0 0.0
    %774 = vmatpush2.msra.mxu0 0.0
    %775 = vmatprep.subr.mxu0 0.0
    %776 = vmatpush2.msra.mxu0 0.0
    %777 = vmatprep.mubr.f32.mxu0 0.0
    %778 = vmatmul.mubr.f32.gmra.mxu0 %v590
    %v779 = vpop.f32.mrf.mxu0
    %v780 = vadd.f32 %v695, %v779
    %v781 = vpop.f32.mrf.mxu0
    %782 = vmatprep.mubr.f32.mxu0 0.0
    %783 = vmatmul.mubr.f32.gmra.mxu0 %v591
    %v784 = vpop.f32.mrf.mxu0
    %v785 = vadd.f32 %v700, %v784
    %v786 = vpop.f32.mrf.mxu0
    %787 = vmatprep.mubr.f32.mxu0 0.0
    %788 = vmatmul.mubr.f32.gmra.mxu0 %v592
    %v789 = vpop.f32.mrf.mxu0
    %v790 = vadd.f32 %v705, %v789
    %v791 = vpop.f32.mrf.mxu0
    %792 = vmatprep.mubr.f32.mxu0 0.0
    %793 = vmatmul.mubr.f32.gmra.mxu0 %v593
    %v794 = vpop.f32.mrf.mxu0
    %v795 = vadd.f32 %v710, %v794
    %v796 = vpop.f32.mrf.mxu0
    %797 = vdwg.mxu0
    %v798 = vlaneseq
    %v799 = vshrl.u32 %v798, 7
    %v800 = vsub.s32 1, %v799
    %v801 = vrot.slane %v36, %v800
    %v802 = vadd.f32 %v780, %v801
    %v803 = vadd.f32 %v785, %v801
    %v804 = vadd.f32 %v790, %v801
    %v805 = vadd.f32 %v795, %v801
    %806 = vst [vmem:[#allocation5] sm:$0xff] %v802
    %807 = vst [vmem:[#allocation5 + $0x8] sm:$0xff] %v803
    %808 = vst [vmem:[#allocation5 + $0x10] sm:$0xff] %v804
    %809 = vst [vmem:[#allocation5 + $0x18] sm:$0xff] %v805
    // Predicated region
    $region22: #{tpu_custom_call.1} parent=1 // pred_check
      _
    $region23: #{tpu_custom_call.1} parent=1 // pred_check_branch
      %811 = sbr.rel (0) target = $region25
    $region24: #{tpu_custom_call.1} parent=1 // pred_region
      %s813 = ssub.s32 512, 512
      %814 = vsyncadd [#allocation4], %s813
      %s815 = sshll.u32 [#allocation5], 4
      %s816 = int_to_ptr.vmem [resolvable:$true] %s815
      %821 = dma.vmem_to_hbm [thread:$0]  %s816, 512, %s4, [#allocation4], 128, 128, 8
    $region25: #{tpu_custom_call.1} parent=1 // pred_fallthru
      _
    // Predicated region
    $region26: #{tpu_custom_call.1} parent=1 // pred_check
      _
    $region27: #{tpu_custom_call.1} parent=1 // pred_check_branch
      %823 = sbr.rel (0) target = $region29
    $region28: #{tpu_custom_call.1} parent=1 // pred_region
      %824 = dma.done [#allocation4], 512
    $region29: #{tpu_custom_call.1} parent=1 // pred_fallthru
      _
    %825 = vsyncpa [#allocation3], 1
    %826 = vsyncpa [#allocation4], 1

</llo_original>
